<compile_context>
chip_gen: v6e
topology: v6e:2x2x1
jax: 0.10.0
libtpu: 0.0.40
codegen_flags: <defaults>
</compile_context>

<pallas_src>
import functools
import math

import jax
import jax.numpy as jnp
from jax.experimental import pallas as pl
from jax.experimental.pallas import tpu as pltpu


def _rmsnorm_kernel(x_ref, g_ref, b_ref, o_ref, *, eps):
    # x_ref: (row_tile, D) in input dtype; g_ref/b_ref: (1, D) f32, resident.
    # Pass 1: mean of squares in f32 (feeds the XLU cross-lane reduction).
    x0 = x_ref[...].astype(jnp.float32)
    norm = jnp.mean(x0 * x0, axis=-1, keepdims=True)
    inv = jax.lax.rsqrt(norm + eps)
    # Pass 2: re-load the VMEM-resident tile for the scale/shift step so the
    # block-sized f32 from pass 1 does not stay live across the reduction
    # (keeps register pressure low; the repeated cast is free VPU slack).
    y = x_ref[...].astype(jnp.float32) * inv * g_ref[...] + b_ref[...]
    o_ref[...] = y.astype(o_ref.dtype)


def _sublane_multiple(dtype) -> int:
    """Minimum row multiple for dense sublane packing of `dtype`."""
    itemsize = jnp.dtype(dtype).itemsize
    return {4: 8, 2: 16, 1: 32}.get(itemsize, 8)


def _device_vmem_and_cores():
    """(physical VMEM bytes per TensorCore, TensorCores per chip).

    Conservative fallbacks (64 MiB / 1 core) if the query is unavailable,
    which is safe on every generation (v5e/v6e: 128 MiB, 1 TC; v7x: 64 MiB,
    2 TCs)."""
    vmem_bytes = 64 * 1024 * 1024
    num_cores = 1
    try:
        info = pltpu.get_tpu_info()
        vmem_bytes = int(getattr(info, "vmem_capacity_bytes", vmem_bytes) or vmem_bytes)
        for attr in ("num_cores", "tensorcores_per_chip", "core_count"):
            v = getattr(info, attr, None)
            if v:
                num_cores = int(v)
                break
    except Exception:
        pass
    return vmem_bytes, num_cores


def _choose_row_tile(rows: int, d: int, in_itemsize: int, sublane: int,
                     tile_budget: int, num_cores: int) -> int:
    """Largest sublane-aligned row tile whose VMEM working set fits the
    byte budget, then split into a core-aware number of grid steps."""
    # Per-row VMEM cost: double-buffered input + double-buffered output
    # (same dtype) + one block-sized f32 working copy (upcast / temporaries).
    bytes_per_row = d * (4 * in_itemsize + 4)
    max_tile = tile_budget // max(bytes_per_row, 1)
    max_tile = max(sublane, (max_tile // sublane) * sublane)

    rows_aligned = pl.cdiv(rows, sublane) * sublane

    if num_cores >= 2:
        # Megacore (v7x): at least 2 steps per core, total a multiple of the
        # core count, so each core's DMA prologue/epilogue can overlap.
        steps = max(2 * num_cores, pl.cdiv(rows, max_tile))
        rem = steps % num_cores
        if rem:
            steps += num_cores - rem
    else:
        # Single TC (v5e/v6e): the grid is a serial loop — fewest steps wins.
        steps = pl.cdiv(rows, max_tile)

    tile = pl.cdiv(rows, steps)
    tile = max(sublane, pl.cdiv(tile, sublane) * sublane)
    return min(tile, max_tile, rows_aligned)


def rmsnorm(x, g, b, *, eps=1e-5, row_tile=None):
    """RMSNorm over the last axis of x.  x: (..., D); g, b: (D,)."""
    orig_shape = x.shape
    D = orig_shape[-1]
    rows = math.prod(orig_shape[:-1]) if len(orig_shape) > 1 else 1

    x2d = x.reshape(rows, D)
    # Hoist the f32 cast of the parameters out of the kernel; their constant
    # (0, 0) block stays resident in VMEM across the whole grid.
    g2d = jnp.asarray(g).reshape(1, D).astype(jnp.float32)
    b2d = jnp.asarray(b).reshape(1, D).astype(jnp.float32)

    itemsize = jnp.dtype(x.dtype).itemsize
    sublane = _sublane_multiple(x.dtype)

    vmem_bytes, num_cores = _device_vmem_and_cores()
    # Scoped VMEM limit: ~5/8 of physical -> ~40 MiB on v7x (64 MiB/TC),
    # ~80 MiB on v5e/v6e (128 MiB). Tile budget leaves headroom inside the
    # scoped limit for g/b, internal scratch and compiler temporaries.
    vmem_limit = int((vmem_bytes * 5) // 8)
    tile_budget = max(vmem_limit - (4 << 20), 4 << 20)

    if row_tile is None:
        row_tile = _choose_row_tile(rows, D, itemsize, sublane,
                                    tile_budget, num_cores)
    else:
        row_tile = max(sublane, pl.cdiv(row_tile, sublane) * sublane)

    # No jnp.pad: ragged last block is handled by Pallas (rows are computed
    # independently; out-of-bounds writes of partial blocks are discarded).
    grid = (pl.cdiv(rows, row_tile),)

    # HBM traffic dominates: one read + one write of the activations plus the
    # (tiny, once) parameter read.
    cost = pl.CostEstimate(
        flops=5 * rows * D,
        transcendentals=rows,
        bytes_accessed=2 * rows * D * itemsize + 2 * D * 4,
    )

    out = pl.pallas_call(
        functools.partial(_rmsnorm_kernel, eps=eps),
        out_shape=jax.ShapeDtypeStruct((rows, D), x.dtype),
        grid_spec=pltpu.PrefetchScalarGridSpec(
            num_scalar_prefetch=0,
            grid=grid,
            in_specs=[
                pl.BlockSpec((row_tile, D), lambda i: (i, 0)),
                pl.BlockSpec((1, D), lambda i: (0, 0)),
                pl.BlockSpec((1, D), lambda i: (0, 0)),
            ],
            out_specs=pl.BlockSpec((row_tile, D), lambda i: (i, 0)),
        ),
        compiler_params=pltpu.CompilerParams(
            dimension_semantics=("parallel",),
            vmem_limit_bytes=vmem_limit,
        ),
        cost_estimate=cost,
    )(x2d, g2d, b2d)

    return out.reshape(orig_shape)


def rmsnorm_ref(x, g, b, eps=1e-5):
    xf = x.astype(jnp.float32)
    norm = jnp.mean(xf * xf, axis=-1, keepdims=True)
    y = xf * jax.lax.rsqrt(norm + eps)
    return (y * g.astype(jnp.float32) + b.astype(jnp.float32)).astype(x.dtype)


if __name__ == "__main__":
    key = jax.random.PRNGKey(0)

    # Primary check: lane-dense dmodel (multiple of 128) — the fast
    # unmasked-store path; parameters match nn.Parameter(ones/zeros(dmodel)).
    batch, seq, dmodel = 2, 8, 128
    x = jax.random.normal(key, (batch, seq, dmodel), dtype=jnp.float32)
    g = jnp.ones((dmodel,), dtype=jnp.float32)
    b = jnp.zeros((dmodel,), dtype=jnp.float32)

    out = jax.block_until_ready(rmsnorm(x, g, b, eps=1e-5))
    ref = rmsnorm_ref(x, g, b, eps=1e-5)
    assert out.shape == x.shape, (out.shape, x.shape)
    assert jnp.allclose(out, ref, atol=1e-5, rtol=1e-5), "f32 mismatch vs reference"

    # Secondary check: ragged row count + sub-128 dmodel + bf16 input
    # (exercises the no-pad ragged-block path and bf16 sublane alignment).
    x2 = jax.random.normal(jax.random.PRNGKey(1), (3, 7, 32), dtype=jnp.bfloat16)
    g2 = jnp.ones((32,), dtype=jnp.bfloat16)
    b2 = jnp.zeros((32,), dtype=jnp.bfloat16)
    out2 = jax.block_until_ready(rmsnorm(x2, g2, b2, eps=1e-5))
    ref2 = rmsnorm_ref(x2, g2, b2, eps=1e-5)
    assert out2.shape == x2.shape
    assert jnp.allclose(out2.astype(jnp.float32), ref2.astype(jnp.float32),
                        atol=2e-2, rtol=2e-2), "bf16 mismatch vs reference"

    # Explicit-row_tile path (forces a multi-step grid with a ragged tail).
    out3 = jax.block_until_ready(rmsnorm(x, g, b, eps=1e-5, row_tile=8))
    assert jnp.allclose(out3, ref, atol=1e-5, rtol=1e-5), "tiled f32 mismatch"

    print("KERNEL_OK")
</pallas_src>

<mosaic_0001>
module attributes {stable_mosaic.version = 11 : i64} {
  func.func @_rmsnorm_kernel(%arg0: i32, %arg1: memref<16x128xf32, #tpu.memory_space<vmem>>, %arg2: memref<1x128xf32, #tpu.memory_space<vmem>>, %arg3: memref<1x128xf32, #tpu.memory_space<vmem>>, %arg4: memref<16x128xf32, #tpu.memory_space<vmem>>) attributes {dimension_semantics = [#tpu.dimension_semantics<parallel>], iteration_bounds = array<i64: 1>, scalar_prefetch = 0 : i64, scratch_operands = 0 : i64, tpu.core_type = #tpu.core_type<tc>, window_params = [{transform_indices = @transform_0, window_bounds = array<i64: 16, 128>}, {pipeline_mode = #tpu.pipeline_mode<synchronous>, transform_indices = @transform_1, window_bounds = array<i64: 1, 128>}, {pipeline_mode = #tpu.pipeline_mode<synchronous>, transform_indices = @transform_2, window_bounds = array<i64: 1, 128>}, {transform_indices = @transform_3, window_bounds = array<i64: 16, 128>}]} {
    %c0 = arith.constant 0 : index
    %c0_0 = arith.constant 0 : index
    %0 = vector.load %arg1[%c0, %c0_0] : memref<16x128xf32, #tpu.memory_space<vmem>>, vector<16x128xf32>
    %1 = arith.mulf %0, %0 : vector<16x128xf32>
    %cst = arith.constant dense<0.000000e+00> : vector<16xf32>
    %2 = vector.multi_reduction <add>, %1, %cst [1] : vector<16x128xf32> to vector<16xf32>
    %3 = vector.shape_cast %2 : vector<16xf32> to vector<16x1xf32>
    %cst_1 = arith.constant 1.280000e+02 : f32
    %4 = vector.broadcast %cst_1 : f32 to vector<16x1xf32>
    %5 = arith.divf %3, %4 : vector<16x1xf32>
    %cst_2 = arith.constant 9.99999974E-6 : f32
    %6 = vector.broadcast %cst_2 : f32 to vector<16x1xf32>
    %7 = arith.addf %5, %6 : vector<16x1xf32>
    %8 = math.rsqrt %7 : vector<16x1xf32>
    %c0_3 = arith.constant 0 : index
    %c0_4 = arith.constant 0 : index
    %9 = vector.load %arg1[%c0_3, %c0_4] : memref<16x128xf32, #tpu.memory_space<vmem>>, vector<16x128xf32>
    %10 = vector.broadcast %8 : vector<16x1xf32> to vector<16x128xf32>
    %11 = arith.mulf %9, %10 : vector<16x128xf32>
    %c0_5 = arith.constant 0 : index
    %c0_6 = arith.constant 0 : index
    %12 = vector.load %arg2[%c0_5, %c0_6] : memref<1x128xf32, #tpu.memory_space<vmem>>, vector<1x128xf32>
    %13 = vector.broadcast %12 : vector<1x128xf32> to vector<16x128xf32>
    %14 = arith.mulf %11, %13 : vector<16x128xf32>
    %c0_7 = arith.constant 0 : index
    %c0_8 = arith.constant 0 : index
    %15 = vector.load %arg3[%c0_7, %c0_8] : memref<1x128xf32, #tpu.memory_space<vmem>>, vector<1x128xf32>
    %16 = vector.broadcast %15 : vector<1x128xf32> to vector<16x128xf32>
    %17 = arith.addf %14, %16 : vector<16x128xf32>
    %c0_9 = arith.constant 0 : index
    %c0_10 = arith.constant 0 : index
    %18 = vector.load %arg4[%c0_9, %c0_10] : memref<16x128xf32, #tpu.memory_space<vmem>>, vector<16x128xf32>
    tpu.vector_store %arg4[%c0_9, %c0_10], %17 {strides = array<i32>} : memref<16x128xf32, #tpu.memory_space<vmem>>, vector<16x128xf32>,
    return
  }
  func.func @transform_0(%arg0: i32) -> (i32, i32) {
    %c0_i32 = arith.constant 0 : i32
    %c0_i32_0 = arith.constant 0 : i32
    return %arg0, %c0_i32 : i32, i32
  }
  func.func @transform_1(%arg0: i32) -> (i32, i32) {
    %c0_i32 = arith.constant 0 : i32
    %c0_i32_0 = arith.constant 0 : i32
    %c0_i32_1 = arith.constant 0 : i32
    return %c0_i32, %c0_i32_0 : i32, i32
  }
  func.func @transform_2(%arg0: i32) -> (i32, i32) {
    %c0_i32 = arith.constant 0 : i32
    %c0_i32_0 = arith.constant 0 : i32
    %c0_i32_1 = arith.constant 0 : i32
    return %c0_i32, %c0_i32_0 : i32, i32
  }
  func.func @transform_3(%arg0: i32) -> (i32, i32) {
    %c0_i32 = arith.constant 0 : i32
    %c0_i32_0 = arith.constant 0 : i32
    return %arg0, %c0_i32 : i32, i32
  }
}

</mosaic_0001>

<llo_original>
// kernel: tpu_custom_call.1
$region0: #{tpu_custom_call.1}
  #allocation0 [shape = 'u32[]', space=smem, size = 0x4, offset = 0x4, fixed_abs, tag = 'smem constant byte address 0x4 - core index']
  #allocation1 [shape = 'u32[144,128]{1,0:T(1,128)}', space=vmem, size = 0x12000, scoped, tag = 'internal scratch']
  %s0 = inlined_call_operand.hbm [shape: f32[16,128], index: 0, kind: input, shape index: {}]
  %s1 = inlined_call_operand.vmem [shape: f32[1,128], index: 1, kind: input, shape index: {}]
  %s2 = inlined_call_operand.vmem [shape: f32[1,128], index: 2, kind: input, shape index: {}]
  %s3 = inlined_call_operand.hbm [shape: f32[16,128], index: 3, kind: output, shape index: {}]
  %s4 = sld [smem:[#allocation0]]
  $region26: #{tpu_custom_call.1} parent=0
    _
  %s6 = ssub.s32 1, %s4
  %s7 = scalar_select 0, %s6, %s4
  $region1: #{tpu_custom_call.1} parent=0
    #allocation2 [shape = 'u8[8192]{0}', space=vmem, size = 0x2000, scoped, tag = 'input window, operand 0, single buffered']
    #allocation3 [shape = 's32[1]{0}', space=sflag, size = 0x4, scoped, tag = 'scoped memory for tpu_custom_call.1']
    #allocation4 [shape = 's32[1]{0}', space=sflag, size = 0x4, scoped, tag = 'scoped memory for tpu_custom_call.1']
    #allocation5 [shape = 'u8[8192]{0}', space=vmem, size = 0x2000, scoped, tag = 'output window, operand 0, single buffered']
    %8 = vsyncpa [#allocation3], 0
    %9 = vsyncpa [#allocation4], 0
    // Predicated region
    $region2: #{tpu_custom_call.1} parent=1 // pred_check
      _
    $region3: #{tpu_custom_call.1} parent=1 // pred_check_branch
      %11 = sbr.rel (0) target = $region5
    $region4: #{tpu_custom_call.1} parent=1 // pred_region
      %s13 = ssub.s32 256, 256
      %14 = vsyncadd [#allocation3], %s13
      %s15 = sshll.u32 [#allocation2], 4
      %s16 = int_to_ptr.vmem [resolvable:$true] %s15
      %21 = dma.hbm_to_vmem [thread:$0]  %s0, 256, %s16, [#allocation3], 128, 128, 8
    $region5: #{tpu_custom_call.1} parent=1 // pred_fallthru
      _
    // Predicated region
    $region6: #{tpu_custom_call.1} parent=1 // pred_check
      _
    $region7: #{tpu_custom_call.1} parent=1 // pred_check_branch
      %23 = sbr.rel (0) target = $region9
    $region8: #{tpu_custom_call.1} parent=1 // pred_region
      _
    $region9: #{tpu_custom_call.1} parent=1 // pred_fallthru
      _
    // Predicated region
    $region10: #{tpu_custom_call.1} parent=1 // pred_check
      _
    $region11: #{tpu_custom_call.1} parent=1 // pred_check_branch
      %25 = sbr.rel (0) target = $region13
    $region12: #{tpu_custom_call.1} parent=1 // pred_region
      _
    $region13: #{tpu_custom_call.1} parent=1 // pred_fallthru
      _
    // Predicated region
    $region14: #{tpu_custom_call.1} parent=1 // pred_check
      _
    $region15: #{tpu_custom_call.1} parent=1 // pred_check_branch
      %27 = sbr.rel (0) target = $region17
    $region16: #{tpu_custom_call.1} parent=1 // pred_region
      %28 = dma.done [#allocation3], 256
    $region17: #{tpu_custom_call.1} parent=1 // pred_fallthru
      _
    %v29 = vld [vmem:[#allocation2] sm:$0xff]
    %v30 = vld [vmem:[#allocation2 + $0x8] sm:$0xff]
    %v31 = vmul.f32 %v29, %v29
    %v32 = vmul.f32 %v30, %v30
    %33 = vadd.xlane.f32.xlu0 %v31
    %v34 = vpop.xlane.xlu0 %33
    %35 = vadd.xlane.f32.xlu0 %v32
    %v36 = vpop.xlane.xlu0 %35
    %v37 = vrcp.pop 128.0
    %v38 = vmul.f32 %v34, %v37
    %v39 = vmul.f32 %v36, %v37
    %v40 = vadd.f32 %v38, 1e-05
    %v41 = vadd.f32 %v39, 1e-05
    %v42 = vrsqrt.pop %v40
    %v43 = vrsqrt.pop %v41
    %v44 = vmul.f32 %v29, %v42
    %v45 = vmul.f32 %v30, %v43
    %v46 = vld [vmem:[%s1] sm:$0x1]
    %v48 = vlaneseq
    %v49 = vshrl.u32 %v48, 7
    %v50 = vsub.s32 0, %v49
    %v51 = vrot.slane %v46, %v50
    %v53 = vmul.f32 %v44, %v51
    %v54 = vmul.f32 %v45, %v51
    %v55 = vld [vmem:[%s2] sm:$0x1]
    %v57 = vlaneseq
    %v58 = vshrl.u32 %v57, 7
    %v59 = vsub.s32 0, %v58
    %v60 = vrot.slane %v55, %v59
    %v62 = vadd.f32 %v53, %v60
    %v63 = vadd.f32 %v54, %v60
    %64 = vst [vmem:[#allocation5] sm:$0xff] %v62
    %65 = vst [vmem:[#allocation5 + $0x8] sm:$0xff] %v63
    // Predicated region
    $region18: #{tpu_custom_call.1} parent=1 // pred_check
      _
    $region19: #{tpu_custom_call.1} parent=1 // pred_check_branch
      %67 = sbr.rel (0) target = $region21
    $region20: #{tpu_custom_call.1} parent=1 // pred_region
      %s69 = ssub.s32 256, 256
      %70 = vsyncadd [#allocation4], %s69
      %s71 = sshll.u32 [#allocation5], 4
      %s72 = int_to_ptr.vmem [resolvable:$true] %s71
      %77 = dma.vmem_to_hbm [thread:$0]  %s72, 256, %s3, [#allocation4], 128, 128, 8
    $region21: #{tpu_custom_call.1} parent=1 // pred_fallthru
      _
    // Predicated region
    $region22: #{tpu_custom_call.1} parent=1 // pred_check
      _
    $region23: #{tpu_custom_call.1} parent=1 // pred_check_branch
      %79 = sbr.rel (0) target = $region25
    $region24: #{tpu_custom_call.1} parent=1 // pred_region
      %80 = dma.done [#allocation4], 256
    $region25: #{tpu_custom_call.1} parent=1 // pred_fallthru
      _
    %81 = vsyncpa [#allocation3], 1
    %82 = vsyncpa [#allocation4], 1

</llo_original>
